<compile_context>
chip_gen: v7x
topology: tpu7x:2x2x1
jax: 0.10.0
libtpu: 0.0.40
codegen_flags: <defaults>
</compile_context>

<pallas_src>
import math
import functools

import jax
import jax.numpy as jnp
from jax import lax
from jax.experimental import pallas as pl
from jax.experimental.pallas import tpu as pltpu


# ---------------------------------------------------------------------------
# Kernels
# ---------------------------------------------------------------------------

def _single_pass_kernel(q_ref, k_ref, v_ref, *rest, scaling, has_mask, has_add,
                        has_w, use_bf16):
    """One (batch, q-tile) grid step: full-Tk logits + softmax + weights@V."""
    idx = 0
    mask_ref = add_ref = None
    if has_mask:
        mask_ref = rest[idx]; idx += 1
    if has_add:
        add_ref = rest[idx]; idx += 1
    ctx_ref = rest[idx]; idx += 1
    w_ref = rest[idx] if has_w else None

    q = q_ref[0]                       # (tq, H)
    k = k_ref[0]                       # (Tk, H)
    v = v_ref[0]                       # (Tk, H)
    if use_bf16 and q.dtype == jnp.float32:
        q = q.astype(jnp.bfloat16)
        k = k.astype(jnp.bfloat16)
        v = v.astype(jnp.bfloat16)

    inv_sqrt = 1.0 / math.sqrt(q_ref.shape[-1])
    if scaling and not has_add:
        # No additive logits -> folding 1/sqrt(H) into q is exactly equivalent
        # and touches tq*H elements instead of tq*Tk.
        q = q * jnp.asarray(inv_sqrt, dtype=q.dtype)

    # q @ k^T contracting the hidden dims directly (NT matmul, no explicit
    # transpose), accumulated in f32 on the MXU.
    logits = lax.dot_general(q, k, (((1,), (1,)), ((), ())),
                             preferred_element_type=jnp.float32)   # (tq, Tk)

    if has_add:
        logits = logits + add_ref[0].astype(jnp.float32)
        if scaling:
            # PyTorch order: (q@k^T + additional_logits) / sqrt(H).
            logits = logits * jnp.float32(inv_sqrt)

    if has_mask:
        logits = jnp.where(mask_ref[0] == 0, jnp.float32(-1000.0), logits)

    mx = jnp.max(logits, axis=-1, keepdims=True)
    ex = jnp.exp(logits - mx)
    denom = jnp.sum(ex, axis=-1, keepdims=True)
    weights = ex * (1.0 / denom)          # exact reciprocal: rows sum to 1

    # Compute the low-precision weights once; reuse for the weights@V matmul
    # and the stored weights output.
    w_lo = weights.astype(ctx_ref.dtype)
    mm_w = w_lo if w_lo.dtype == v.dtype else weights.astype(v.dtype)
    ctx = jnp.dot(mm_w, v, preferred_element_type=jnp.float32)
    ctx_ref[0] = ctx.astype(ctx_ref.dtype)
    if has_w:
        w_ref[0] = w_lo if w_ref.dtype == w_lo.dtype else weights.astype(w_ref.dtype)


def _flash_kernel(q_ref, k_ref, v_ref, *rest, scaling, has_mask, has_add,
                  has_w, n_k, tk, kv_len, kv_padded, use_bf16):
    """Tk-tiled attention.

    Pass 1 (s in [0, n_k)):     flash-style online softmax, accumulate context
                                in VMEM scratch (m, l, acc), write ctx at the
                                last chunk.
    Pass 2 (s in [n_k, 2n_k)):  only when weights are requested — recompute the
                                chunk logits and stream the normalized weights
                                out chunk by chunk using the final (m, l).
    """
    idx = 0
    mask_ref = add_ref = None
    if has_mask:
        mask_ref = rest[idx]; idx += 1
    if has_add:
        add_ref = rest[idx]; idx += 1
    ctx_ref = rest[idx]; idx += 1
    if has_w:
        w_ref = rest[idx]; idx += 1
    else:
        w_ref = None
    m_sc, l_sc, acc_sc = rest[idx], rest[idx + 1], rest[idx + 2]

    s = pl.program_id(2)
    chunk = s % n_k                       # Tk-chunk index (same in both passes)

    q = q_ref[0]                          # (tq, H)
    k = k_ref[0]                          # (tk, H)
    if use_bf16 and q.dtype == jnp.float32:
        q = q.astype(jnp.bfloat16)
        k = k.astype(jnp.bfloat16)

    inv_sqrt = 1.0 / math.sqrt(q_ref.shape[-1])
    if scaling and not has_add:
        q = q * jnp.asarray(inv_sqrt, dtype=q.dtype)

    logits = lax.dot_general(q, k, (((1,), (1,)), ((), ())),
                             preferred_element_type=jnp.float32)   # (tq, tk)
    if has_add:
        logits = logits + add_ref[0].astype(jnp.float32)
        if scaling:
            logits = logits * jnp.float32(inv_sqrt)
    if has_mask:
        logits = jnp.where(mask_ref[0] == 0, jnp.float32(-1000.0), logits)
    if kv_padded:
        # Keys beyond the true Tk were zero-padded in the wrapper; exclude them
        # exactly so they contribute nothing to the softmax.
        col = lax.broadcasted_iota(jnp.int32, logits.shape, 1) + chunk * tk
        logits = jnp.where(col < kv_len, logits, -jnp.inf)

    @pl.when(s == 0)
    def _init():
        m_sc[...] = jnp.full_like(m_sc, -jnp.inf)
        l_sc[...] = jnp.zeros_like(l_sc)
        acc_sc[...] = jnp.zeros_like(acc_sc)

    def _pass1():
        m_prev = m_sc[...]
        m_new = jnp.maximum(m_prev, jnp.max(logits, axis=-1, keepdims=True))
        alpha = jnp.exp(m_prev - m_new)
        p = jnp.exp(logits - m_new)                       # (tq, tk)
        l_sc[...] = alpha * l_sc[...] + jnp.sum(p, axis=-1, keepdims=True)
        v = v_ref[0]
        if use_bf16 and v.dtype == jnp.float32:
            v = v.astype(jnp.bfloat16)
        p_mm = p.astype(v.dtype)
        acc_sc[...] = alpha * acc_sc[...] + jnp.dot(
            p_mm, v, preferred_element_type=jnp.float32)
        m_sc[...] = m_new

        @pl.when(s == n_k - 1)
        def _finalize():
            ctx_ref[0] = (acc_sc[...] * (1.0 / l_sc[...])).astype(ctx_ref.dtype)

    if has_w:
        pl.when(s < n_k)(_pass1)

        def _pass2():
            w = jnp.exp(logits - m_sc[...]) * (1.0 / l_sc[...])
            w_ref[0] = w.astype(w_ref.dtype)

        pl.when(s >= n_k)(_pass2)
    else:
        _pass1()


# ---------------------------------------------------------------------------
# Wrapper
# ---------------------------------------------------------------------------

def _round_up(x, m):
    return ((x + m - 1) // m) * m


def _vmem_capacity_bytes():
    try:
        return int(pltpu.get_tpu_info().vmem_capacity_bytes)
    except Exception:
        return 64 * 1024 * 1024       # conservative: v7x per-core VMEM


def _pad_axis(x, axis, new_size):
    pad = new_size - x.shape[axis]
    if pad <= 0:
        return x
    widths = [(0, 0)] * x.ndim
    widths[axis] = (0, pad)
    return jnp.pad(x, widths)


def key_val_attention(query, keys, values, mask=None, additional_logits=None,
                      scaling=False, dropout_ratio=0.0, *,
                      return_weights=True, use_bf16_matmul=False,
                      block_q=None, block_k=None):
    """JAX/Pallas equivalent of KeyValAttention.forward (inference).

    Returns (context_vector, weights) with PyTorch shapes/semantics, or just
    the context vector if return_weights=False.
    """
    # TODO(synk): dropout on the attention weights (nn.Dropout) is a
    # training-time stochastic op; with dropout_ratio=0 it is the identity.
    del dropout_ratio

    squeeze_query = query.ndim == keys.ndim - 1          # forward_2d path
    if squeeze_query:
        query = query[..., None, :]

    B, Tq, H = query.shape
    _, Tk, _ = keys.shape
    out_dtype = query.dtype
    elt = jnp.dtype(query.dtype).itemsize

    has_mask = mask is not None
    has_add = additional_logits is not None

    # Keep side inputs un-broadcast: singleton dims are broadcast inside the
    # kernel via index maps (no O(B*Tq*Tk) HBM materialization).
    if has_mask:
        mask3 = jnp.asarray(mask).astype(jnp.int32)
        if mask3.ndim == 2:
            mask3 = mask3[:, None, :]                    # (B, 1, Tk)
    if has_add:
        add3 = jnp.asarray(additional_logits)
        while add3.ndim < 3:
            add3 = add3[None]

    vmem_cap = _vmem_capacity_bytes()
    budget = max(vmem_cap - (16 << 20), 16 << 20)        # headroom for scratch
    big_vmem = vmem_cap > (96 << 20)                     # v5e/v6e (128 MiB)

    # ---- Tq tiling: bounded tile, tail padding, megacore occupancy ----------
    tq_cap = 512 if big_vmem else 256
    if block_q is None:
        bq = min(Tq, tq_cap)
        # v7x has 2 TensorCores: make sure there are >= 2 parallel grid steps.
        if B * pl.cdiv(Tq, bq) < 2 and Tq >= 16:
            bq = _round_up(pl.cdiv(Tq, 2), 8)
    else:
        bq = min(block_q, Tq)
    if bq < Tq:
        bq = _round_up(bq, 8)            # sublane alignment for partial blocks
    n_q = pl.cdiv(Tq, bq)
    Tq_pad = n_q * bq

    # ---- pick single-pass (full-Tk logits) vs. flash (Tk-tiled) path --------
    def est_single(tq):
        side = 0
        if has_mask:
            side += 2 * min(mask3.shape[1], tq) * Tk * 4
        if has_add:
            side += 2 * min(add3.shape[1], tq) * Tk * add3.dtype.itemsize
        return (2 * (tq * H + 2 * Tk * H) * elt              # q, k, v (x2 buf)
                + 2 * tq * H * elt                           # ctx out
                + (2 * tq * Tk * elt if return_weights else 0)
                + side
                + 4 * tq * Tk * 4)                           # f32 temporaries

    use_flash = False
    if block_k is not None and block_k < Tk:
        use_flash = True
    elif est_single(bq) > budget:
        shrunk = False
        for cand in (256, 128):                # try a smaller Tq tile first
            if cand < bq and est_single(cand) <= budget:
                bq = cand
                n_q = pl.cdiv(Tq, bq)
                Tq_pad = n_q * bq
                shrunk = True
                break
        use_flash = not shrunk

    if use_flash:
        def est_flash(tq, tk):
            side = 0
            if has_mask:
                side += 2 * min(mask3.shape[1], tq) * tk * 4
            if has_add:
                side += 2 * min(add3.shape[1], tq) * tk * add3.dtype.itemsize
            return (2 * tq * H * elt + 4 * tk * H * elt
                    + 2 * tq * H * elt
                    + (2 * tq * tk * elt if return_weights else 0)
                    + side
                    + tq * (H + 2) * 4                      # m/l/acc scratch
                    + 3 * tq * tk * 4)                      # f32 temporaries

        if block_k is None:
            bk = 512 if big_vmem else 256
            while bk > 128 and est_flash(bq, bk) > budget:
                bk //= 2
        else:
            bk = max(128, _round_up(block_k, 128))
        bk = min(bk, _round_up(Tk, 128))
        n_k = pl.cdiv(Tk, bk)
        Tk_pad = n_k * bk
        est = est_flash(bq, bk)
    else:
        bk = Tk
        n_k = 1
        Tk_pad = Tk
        est = est_single(bq)

    kv_padded = Tk_pad != Tk

    # ---- pad main inputs (padded rows/cols are sliced off / masked out) -----
    q_p = _pad_axis(query, 1, Tq_pad)
    k_p = _pad_axis(keys, 1, Tk_pad)
    v_p = _pad_axis(values, 1, Tk_pad)
    inputs = [q_p, k_p, v_p]

    if use_flash:
        q_spec = pl.BlockSpec((1, bq, H), lambda b, t, s: (b, t, 0))
        k_spec = pl.BlockSpec((1, bk, H), lambda b, t, s: (b, s % n_k, 0))
        # V is only consumed in pass 1; clamping its index avoids useless V
        # DMAs during the weights pass.
        v_spec = pl.BlockSpec((1, bk, H),
                              lambda b, t, s: (b, jnp.minimum(s, n_k - 1), 0))
    else:
        q_spec = pl.BlockSpec((1, bq, H), lambda b, t: (b, t, 0))
        k_spec = pl.BlockSpec((1, Tk, H), lambda b, t: (b, 0, 0))
        v_spec = pl.BlockSpec((1, Tk, H), lambda b, t: (b, 0, 0))
    in_specs = [q_spec, k_spec, v_spec]

    def side_spec_and_input(arr):
        a = arr
        if a.shape[1] != 1:
            a = _pad_axis(a, 1, Tq_pad)
        if a.shape[2] != 1:
            a = _pad_axis(a, 2, Tk_pad)
        b1 = a.shape[0] == 1
        q1 = a.shape[1] == 1
        k1 = a.shape[2] == 1
        blk = (1, 1 if q1 else bq, 1 if k1 else bk)
        if use_flash:
            def imap(b, t, s):
                return (0 if b1 else b, 0 if q1 else t, 0 if k1 else s % n_k)
        else:
            def imap(b, t):
                return (0 if b1 else b, 0 if q1 else t, 0)
        return a, pl.BlockSpec(blk, imap)

    if has_mask:
        m_in, m_spec = side_spec_and_input(mask3)
        inputs.append(m_in)
        in_specs.append(m_spec)
    if has_add:
        a_in, a_spec = side_spec_and_input(add3)
        inputs.append(a_in)
        in_specs.append(a_spec)

    out_shape = [jax.ShapeDtypeStruct((B, Tq_pad, H), out_dtype)]
    if use_flash:
        out_specs = [pl.BlockSpec((1, bq, H), lambda b, t, s: (b, t, 0))]
    else:
        out_specs = [pl.BlockSpec((1, bq, H), lambda b, t: (b, t, 0))]
    if return_weights:
        out_shape.append(jax.ShapeDtypeStruct((B, Tq_pad, Tk_pad), out_dtype))
        if use_flash:
            out_specs.append(pl.BlockSpec(
                (1, bq, bk), lambda b, t, s: (b, t, jnp.maximum(s - n_k, 0))))
        else:
            out_specs.append(pl.BlockSpec((1, bq, Tk), lambda b, t: (b, t, 0)))

    if use_flash:
        n_steps = 2 * n_k if return_weights else n_k
        grid = (B, n_q, n_steps)
        kernel = functools.partial(
            _flash_kernel, scaling=scaling, has_mask=has_mask, has_add=has_add,
            has_w=return_weights, n_k=n_k, tk=bk, kv_len=Tk,
            kv_padded=kv_padded, use_bf16=use_bf16_matmul)
        scratch = [pltpu.VMEM((bq, 1), jnp.float32),
                   pltpu.VMEM((bq, 1), jnp.float32),
                   pltpu.VMEM((bq, H), jnp.float32)]
        dims = ("parallel", "parallel", "arbitrary")
    else:
        grid = (B, n_q)
        kernel = functools.partial(
            _single_pass_kernel, scaling=scaling, has_mask=has_mask,
            has_add=has_add, has_w=return_weights, use_bf16=use_bf16_matmul)
        scratch = []
        dims = ("parallel", "parallel")

    # Always set the scoped-VMEM limit (v5e default is only 16 MiB), capped at
    # capacity - 16 MiB headroom (≈48 MiB on v7x, ≈112 MiB on v5e/v6e).
    vmem_limit = int(min(max(est + (4 << 20), 32 << 20), budget))
    compiler_params = pltpu.CompilerParams(
        dimension_semantics=dims, vmem_limit_bytes=vmem_limit)

    outs = pl.pallas_call(
        kernel,
        grid_spec=pltpu.PrefetchScalarGridSpec(
            num_scalar_prefetch=0,
            grid=grid,
            in_specs=in_specs,
            out_specs=tuple(out_specs),
            scratch_shapes=scratch),
        out_shape=tuple(out_shape),
        compiler_params=compiler_params,
    )(*inputs)

    ctx = outs[0][:, :Tq, :]
    if return_weights:
        w = outs[1][:, :Tq, :Tk]
    if squeeze_query:
        ctx = ctx[:, 0, :]
        if return_weights:
            w = w[:, 0, :]
    return (ctx, w) if return_weights else ctx


# ---------------------------------------------------------------------------
# Pure-JAX reference (mirrors PyTorch forward_3d exactly)
# ---------------------------------------------------------------------------

def _reference(query, keys, values, mask=None, additional_logits=None,
               scaling=False):
    logits = jnp.einsum("bqh,bkh->bqk", query.astype(jnp.float32),
                        keys.astype(jnp.float32))
    if additional_logits is not None:
        logits = logits + additional_logits
    if scaling:
        logits = logits / math.sqrt(query.shape[-1])
    if mask is not None:
        m = mask if mask.ndim == logits.ndim else mask[:, None, :]
        logits = jnp.where(m == 0, -1000.0, logits)
    weights = jax.nn.softmax(logits, axis=-1)
    ctx = jnp.einsum("bqk,bkh->bqh", weights, values.astype(jnp.float32))
    return ctx, weights


if __name__ == "__main__":
    root = jax.random.PRNGKey(0)
    kq, kk, kv, km, ka, kq2, kk2, kv2, km2, ka2 = jax.random.split(root, 10)

    # ---- small shapes: single-pass path ------------------------------------
    B, Tq, Tk, H = 2, 8, 8, 32
    query = jax.random.normal(kq, (B, Tq, H), dtype=jnp.float32)
    keys = jax.random.normal(kk, (B, Tk, H), dtype=jnp.float32)
    values = jax.random.normal(kv, (B, Tk, H), dtype=jnp.float32)
    mask = (jax.random.uniform(km, (B, Tk)) > 0.3).astype(jnp.float32)
    add_logits = jax.random.normal(ka, (B, Tq, Tk), dtype=jnp.float32)

    # scaling + 2D mask + additional_logits (PyTorch order: add, scale, mask)
    ctx, w = key_val_attention(query, keys, values, mask=mask,
                               additional_logits=add_logits, scaling=True)
    jax.block_until_ready((ctx, w))
    ctx_r, w_r = _reference(query, keys, values, mask=mask,
                            additional_logits=add_logits, scaling=True)
    assert jnp.allclose(ctx, ctx_r, atol=1e-3, rtol=1e-3), "context mismatch (single)"
    assert jnp.allclose(w, w_r, atol=1e-3, rtol=1e-3), "weights mismatch (single)"

    # no mask / no additional logits (specialized kernel: fewer inputs)
    ctx, w = key_val_attention(query, keys, values, scaling=False)
    ctx_r, w_r = _reference(query, keys, values, scaling=False)
    assert jnp.allclose(ctx, ctx_r, atol=1e-3, rtol=1e-3)
    assert jnp.allclose(w, w_r, atol=1e-3, rtol=1e-3)

    # 2-D query path (forward_2d)
    q2 = query[:, 0, :]
    ctx2, w2 = key_val_attention(q2, keys, values, mask=mask, scaling=True)
    ctx2_r, w2_r = _reference(q2[:, None, :], keys, values, mask=mask, scaling=True)
    assert jnp.allclose(ctx2, ctx2_r[:, 0, :], atol=1e-3, rtol=1e-3)
    assert jnp.allclose(w2, w2_r[:, 0, :], atol=1e-3, rtol=1e-3)

    # context-only output (skips the (B,Tq,Tk) weights writeback)
    ctx_only = key_val_attention(query, keys, values, mask=mask, scaling=True,
                                 return_weights=False)
    ctx_r, _ = _reference(query, keys, values, mask=mask, scaling=True)
    assert jnp.allclose(ctx_only, ctx_r, atol=1e-3, rtol=1e-3)

    # optional bf16 MXU path (looser tolerance: bf16 rounding on the logits)
    ctx_bf, _ = key_val_attention(query, keys, values, scaling=True,
                                  use_bf16_matmul=True)
    ctx_r, _ = _reference(query, keys, values, scaling=True)
    assert jnp.allclose(ctx_bf, ctx_r, atol=1e-1, rtol=1e-1)

    # ---- Tk-tiled flash path (online softmax + chunked weights writeback) ---
    B2, Tq2, Tk2, H2 = 2, 20, 300, 64      # exercises Tq- and Tk-padding too
    q_l = jax.random.normal(kq2, (B2, Tq2, H2), dtype=jnp.float32)
    k_l = jax.random.normal(kk2, (B2, Tk2, H2), dtype=jnp.float32)
    v_l = jax.random.normal(kv2, (B2, Tk2, H2), dtype=jnp.float32)
    m_l = (jax.random.uniform(km2, (B2, Tk2)) > 0.2).astype(jnp.float32)
    a_l = jax.random.normal(ka2, (B2, Tq2, Tk2), dtype=jnp.float32)
    ctx_f, w_f = key_val_attention(q_l, k_l, v_l, mask=m_l,
                                   additional_logits=a_l, scaling=True,
                                   block_q=8, block_k=128)
    jax.block_until_ready((ctx_f, w_f))
    ctx_fr, w_fr = _reference(q_l, k_l, v_l, mask=m_l,
                              additional_logits=a_l, scaling=True)
    assert jnp.allclose(ctx_f, ctx_fr, atol=2e-3, rtol=2e-3), "context mismatch (flash)"
    assert jnp.allclose(w_f, w_fr, atol=2e-3, rtol=2e-3), "weights mismatch (flash)"

    print("KERNEL_OK")
</pallas_src>

<mosaic_0001>
module attributes {stable_mosaic.version = 11 : i64} {
  func.func @_single_pass_kernel(%arg0: i32, %arg1: i32, %arg2: memref<1x8x32xf32, #tpu.memory_space<vmem>>, %arg3: memref<1x8x32xf32, #tpu.memory_space<vmem>>, %arg4: memref<1x8x32xf32, #tpu.memory_space<vmem>>, %arg5: memref<1x1x8xi32, #tpu.memory_space<vmem>>, %arg6: memref<1x8x8xf32, #tpu.memory_space<vmem>>, %arg7: memref<1x8x32xf32, #tpu.memory_space<vmem>>, %arg8: memref<1x8x8xf32, #tpu.memory_space<vmem>>) attributes {dimension_semantics = [#tpu.dimension_semantics<parallel>, #tpu.dimension_semantics<parallel>], iteration_bounds = array<i64: 2, 1>, scalar_prefetch = 0 : i64, scratch_operands = 0 : i64, tpu.core_type = #tpu.core_type<tc>, window_params = [{transform_indices = @transform_0, window_bounds = array<i64: 1, 8, 32>}, {transform_indices = @transform_1, window_bounds = array<i64: 1, 8, 32>}, {transform_indices = @transform_2, window_bounds = array<i64: 1, 8, 32>}, {transform_indices = @transform_3, window_bounds = array<i64: 1, 1, 8>}, {transform_indices = @transform_4, window_bounds = array<i64: 1, 8, 8>}, {transform_indices = @transform_5, window_bounds = array<i64: 1, 8, 32>}, {transform_indices = @transform_6, window_bounds = array<i64: 1, 8, 8>}]} {
    %c0 = arith.constant 0 : index
    %c0_0 = arith.constant 0 : index
    %c0_1 = arith.constant 0 : index
    %0 = vector.load %arg2[%c0, %c0_0, %c0_1] : memref<1x8x32xf32, #tpu.memory_space<vmem>>, vector<1x8x32xf32>
    %1 = vector.shape_cast %0 : vector<1x8x32xf32> to vector<8x32xf32>
    %c0_2 = arith.constant 0 : index
    %c0_3 = arith.constant 0 : index
    %c0_4 = arith.constant 0 : index
    %2 = vector.load %arg3[%c0_2, %c0_3, %c0_4] : memref<1x8x32xf32, #tpu.memory_space<vmem>>, vector<1x8x32xf32>
    %3 = vector.shape_cast %2 : vector<1x8x32xf32> to vector<8x32xf32>
    %c0_5 = arith.constant 0 : index
    %c0_6 = arith.constant 0 : index
    %c0_7 = arith.constant 0 : index
    %4 = vector.load %arg4[%c0_5, %c0_6, %c0_7] : memref<1x8x32xf32, #tpu.memory_space<vmem>>, vector<1x8x32xf32>
    %5 = vector.shape_cast %4 : vector<1x8x32xf32> to vector<8x32xf32>
    %cst = arith.constant dense<0.000000e+00> : vector<8x8xf32>
    %6 = tpu.matmul %1, %3, %cst {dimension_numbers = #tpu.dot_dimension_numbers<[1], [1], [0], [0], [0, 0, 1, 0], [], []>} : vector<8x32xf32>, vector<8x32xf32>, vector<8x8xf32> -> vector<8x8xf32>
    %c0_8 = arith.constant 0 : index
    %c0_9 = arith.constant 0 : index
    %c0_10 = arith.constant 0 : index
    %7 = vector.load %arg6[%c0_8, %c0_9, %c0_10] : memref<1x8x8xf32, #tpu.memory_space<vmem>>, vector<1x8x8xf32>
    %8 = vector.shape_cast %7 : vector<1x8x8xf32> to vector<8x8xf32>
    %9 = arith.addf %6, %8 : vector<8x8xf32>
    %cst_11 = arith.constant 0.176776692 : f32
    %10 = vector.broadcast %cst_11 : f32 to vector<8x8xf32>
    %11 = arith.mulf %9, %10 : vector<8x8xf32>
    %c0_12 = arith.constant 0 : index
    %c0_13 = arith.constant 0 : index
    %c0_14 = arith.constant 0 : index
    %12 = vector.load %arg5[%c0_12, %c0_13, %c0_14] : memref<1x1x8xi32, #tpu.memory_space<vmem>>, vector<1x1x8xi32>
    %13 = vector.shape_cast %12 : vector<1x1x8xi32> to vector<1x8xi32>
    %c0_i32 = arith.constant 0 : i32
    %14 = vector.broadcast %c0_i32 : i32 to vector<1x8xi32>
    %15 = arith.cmpi eq, %13, %14 : vector<1x8xi32>
    %cst_15 = arith.constant -1.000000e+03 : f32
    %16 = vector.shape_cast %15 : vector<1x8xi1> to vector<1x8xi1>
    %17 = vector.broadcast %16 : vector<1x8xi1> to vector<8x8xi1>
    %18 = vector.broadcast %cst_15 : f32 to vector<8x8xf32>
    %19 = arith.select %17, %18, %11 : vector<8x8xi1>, vector<8x8xf32>
    %cst_16 = arith.constant dense<0xFF800000> : vector<8xf32>
    %20 = vector.multi_reduction <maximumf>, %19, %cst_16 [1] : vector<8x8xf32> to vector<8xf32>
    %21 = vector.shape_cast %20 : vector<8xf32> to vector<8x1xf32>
    %22 = vector.broadcast %21 : vector<8x1xf32> to vector<8x8xf32>
    %23 = arith.subf %19, %22 : vector<8x8xf32>
    %24 = math.exp %23 : vector<8x8xf32>
    %cst_17 = arith.constant dense<0.000000e+00> : vector<8xf32>
    %25 = vector.multi_reduction <add>, %24, %cst_17 [1] : vector<8x8xf32> to vector<8xf32>
    %26 = vector.shape_cast %25 : vector<8xf32> to vector<8x1xf32>
    %cst_18 = arith.constant 1.000000e+00 : f32
    %27 = vector.broadcast %cst_18 : f32 to vector<8x1xf32>
    %28 = arith.divf %27, %26 : vector<8x1xf32>
    %29 = vector.broadcast %28 : vector<8x1xf32> to vector<8x8xf32>
    %30 = arith.mulf %24, %29 : vector<8x8xf32>
    %cst_19 = arith.constant dense<0.000000e+00> : vector<8x32xf32>
    %31 = tpu.matmul %30, %5, %cst_19 {dimension_numbers = #tpu.dot_dimension_numbers<[1], [0], [0], [1], [0, 0, 1, 1], [], []>} : vector<8x8xf32>, vector<8x32xf32>, vector<8x32xf32> -> vector<8x32xf32>
    %c0_20 = arith.constant 0 : index
    %c0_21 = arith.constant 0 : index
    %c0_22 = arith.constant 0 : index
    %32 = vector.load %arg7[%c0_20, %c0_21, %c0_22] : memref<1x8x32xf32, #tpu.memory_space<vmem>>, vector<1x8x32xf32>
    %33 = vector.shape_cast %32 : vector<1x8x32xf32> to vector<8x32xf32>
    %34 = vector.shape_cast %31 : vector<8x32xf32> to vector<1x8x32xf32>
    tpu.vector_store %arg7[%c0_20, %c0_21, %c0_22], %34 {strides = array<i32>} : memref<1x8x32xf32, #tpu.memory_space<vmem>>, vector<1x8x32xf32>,
    %c0_23 = arith.constant 0 : index
    %c0_24 = arith.constant 0 : index
    %c0_25 = arith.constant 0 : index
    %35 = vector.load %arg8[%c0_23, %c0_24, %c0_25] : memref<1x8x8xf32, #tpu.memory_space<vmem>>, vector<1x8x8xf32>
    %36 = vector.shape_cast %35 : vector<1x8x8xf32> to vector<8x8xf32>
    %37 = vector.shape_cast %30 : vector<8x8xf32> to vector<1x8x8xf32>
    tpu.vector_store %arg8[%c0_23, %c0_24, %c0_25], %37 {strides = array<i32>} : memref<1x8x8xf32, #tpu.memory_space<vmem>>, vector<1x8x8xf32>,
    return
  }
  func.func @transform_0(%arg0: i32, %arg1: i32) -> (i32, i32, i32) {
    %c0_i32 = arith.constant 0 : i32
    %c0_i32_0 = arith.constant 0 : i32
    return %arg0, %arg1, %c0_i32 : i32, i32, i32
  }
  func.func @transform_1(%arg0: i32, %arg1: i32) -> (i32, i32, i32) {
    %c0_i32 = arith.constant 0 : i32
    %c0_i32_0 = arith.constant 0 : i32
    %c0_i32_1 = arith.constant 0 : i32
    return %arg0, %c0_i32, %c0_i32_0 : i32, i32, i32
  }
  func.func @transform_2(%arg0: i32, %arg1: i32) -> (i32, i32, i32) {
    %c0_i32 = arith.constant 0 : i32
    %c0_i32_0 = arith.constant 0 : i32
    %c0_i32_1 = arith.constant 0 : i32
    return %arg0, %c0_i32, %c0_i32_0 : i32, i32, i32
  }
  func.func @transform_3(%arg0: i32, %arg1: i32) -> (i32, i32, i32) {
    %c0_i32 = arith.constant 0 : i32
    %c0_i32_0 = arith.constant 0 : i32
    %c0_i32_1 = arith.constant 0 : i32
    return %arg0, %c0_i32, %c0_i32_0 : i32, i32, i32
  }
  func.func @transform_4(%arg0: i32, %arg1: i32) -> (i32, i32, i32) {
    %c0_i32 = arith.constant 0 : i32
    %c0_i32_0 = arith.constant 0 : i32
    return %arg0, %arg1, %c0_i32 : i32, i32, i32
  }
  func.func @transform_5(%arg0: i32, %arg1: i32) -> (i32, i32, i32) {
    %c0_i32 = arith.constant 0 : i32
    %c0_i32_0 = arith.constant 0 : i32
    return %arg0, %arg1, %c0_i32 : i32, i32, i32
  }
  func.func @transform_6(%arg0: i32, %arg1: i32) -> (i32, i32, i32) {
    %c0_i32 = arith.constant 0 : i32
    %c0_i32_0 = arith.constant 0 : i32
    return %arg0, %arg1, %c0_i32 : i32, i32, i32
  }
}

</mosaic_0001>

<llo_original>
// kernel: tpu_custom_call.1
$region0: #{tpu_custom_call.1}
  #allocation0 [shape = 'u32[]', space=smem, size = 0x4, offset = 0x4, fixed_abs, tag = 'smem constant byte address 0x4 - core index']
  #allocation1 [shape = 'u32[144,128]{1,0:T(1,128)}', space=vmem, size = 0x12000, scoped, tag = 'internal scratch']
  %s0 = inlined_call_operand.hbm [shape: f32[2,8,32], index: 0, kind: input, shape index: {}]
  %s1 = inlined_call_operand.hbm [shape: f32[2,8,32], index: 1, kind: input, shape index: {}]
  %s2 = inlined_call_operand.hbm [shape: f32[2,8,32], index: 2, kind: input, shape index: {}]
  %s3 = inlined_call_operand.vmem [shape: s32[2,1,8], index: 3, kind: input, shape index: {}]
  %s4 = inlined_call_operand.hbm [shape: f32[2,8,8], index: 4, kind: input, shape index: {}]
  %s5 = inlined_call_operand.hbm [shape: f32[2,8,32], index: 5, kind: output, shape index: {0}]
  %s6 = inlined_call_operand.hbm [shape: f32[2,8,8], index: 6, kind: output, shape index: {1}]
  %7 = xla_tuple %s5, %s6
  %s8 = sld [smem:[#allocation0]]
  $region77: #{tpu_custom_call.1} parent=0
    _
  %s10 = ssub.s32 1, %s8
  %s11 = scalar_select 0, %s10, %s8
  $region1: #{tpu_custom_call.1} parent=0
    #allocation2 [shape = 'u8[8192]{0}', space=vmem, size = 0x2000, scoped, tag = 'input window, operand 0']
    #allocation3 [shape = 's32[2]{0}', space=sflag, size = 0x8, scoped, tag = 'scoped memory for tpu_custom_call.1']
    #allocation4 [shape = 's32[2]{0}', space=sflag, size = 0x8, scoped, tag = 'scoped memory for tpu_custom_call.1']
    #allocation5 [shape = 'u8[8192]{0}', space=vmem, size = 0x2000, scoped, tag = 'input window, operand 1']
    #allocation6 [shape = 's32[2]{0}', space=sflag, size = 0x8, scoped, tag = 'scoped memory for tpu_custom_call.1']
    #allocation7 [shape = 'u8[8192]{0}', space=vmem, size = 0x2000, scoped, tag = 'input window, operand 2']
    #allocation8 [shape = 'u8[8192]{0}', space=vmem, size = 0x2000, scoped, tag = 'input window, operand 4']
    #allocation9 [shape = 's32[2]{0}', space=sflag, size = 0x8, scoped, tag = 'scoped memory for tpu_custom_call.1']
    #allocation10 [shape = 'u8[8192]{0}', space=vmem, size = 0x2000, scoped, tag = 'output window, operand 0']
    #allocation11 [shape = 'u8[8192]{0}', space=vmem, size = 0x2000, scoped, tag = 'output window, operand 1']
    #allocation12 [shape = 's32[2]{0}', space=sflag, size = 0x8, scoped, tag = 'scoped memory for tpu_custom_call.1']
    %12 = vsyncpa [#allocation3], 0
    %s13 = scalar_lea.sflag [#allocation3], 1
    %14 = vsyncpa %s13, 0
    %15 = vsyncpa [#allocation6], 0
    %s16 = scalar_lea.sflag [#allocation6], 1
    %17 = vsyncpa %s16, 0
    %18 = vsyncpa [#allocation9], 0
    %s19 = scalar_lea.sflag [#allocation9], 1
    %20 = vsyncpa %s19, 0
    %21 = vsyncpa [#allocation4], 0
    %s22 = scalar_lea.sflag [#allocation4], 1
    %23 = vsyncpa %s22, 0
    %24 = vsyncpa [#allocation12], 0
    %s25 = scalar_lea.sflag [#allocation12], 1
    %26 = vsyncpa %s25, 0
    loop: start=0, step=1, limit=4
    $region2: #{tpu_custom_call.1} parent=1 // loop_pre_header
      _
    $region3: #{tpu_custom_call.1} parent=1 // loop_header
      %s28 = sphi 0, %s32
      %p29 = scmp.ge.s32.totalorder %s28, 4
      %s35 = sphi 0, %s47
      %s36 = sphi 0, %s43
      %s37 = sphi 0, %s35
      %s38 = sphi 0, %s36
      %s39 = sphi 0, %s37
      %s40 = sphi 0, %s38
      %s52 = sphi 0, %s54
      %s55 = sphi 0, %s52
      %s56 = sphi 0, %s55
      %s72 = sphi 0, %s56
      %s78 = sphi 0, %s80
      %s81 = sphi 0, %s78
      %s82 = sphi 0, %s81
      %s98 = sphi 0, %s82
      %s104 = sphi 0, %s106
      %s107 = sphi 0, %s104
      %s108 = sphi 0, %s107
      %s124 = sphi 0, %s108
      %s130 = sphi 0, %s132
      %s133 = sphi 0, %s130
      %s134 = sphi 0, %s133
      %s150 = sphi 0, %s134
      %s158 = sphi 0, %s160
      %s161 = sphi 0, %s158
      %s162 = sphi 0, %s161
      %s178 = sphi 0, %s162
      %s186 = sphi 0, %s188
      %s189 = sphi 0, %s186
      %s190 = sphi 0, %s189
      %s206 = sphi 0, %s190
      %s214 = sphi 0, %s216
      %s217 = sphi 0, %s214
      %s218 = sphi 0, %s217
      %s234 = sphi 0, %s218
    $region4: #{tpu_custom_call.1} parent=1 // loop_header_branch
      %31 = sbr.rel (%p29) target = $region8
    $region5: #{tpu_custom_call.1} parent=1 // loop_body
      %s33 = ssub.s32 %s28, 1
      %s34 = ssub.s32 %s28, 2
      %s41 = sadd.s32 1, %s36
      %p42 = scmp.ge.s32.totalorder %s41, 1
      %s43 = scalar_select %p42, 0, %s41
      %s44 = sadd.s32 1, %s35
      %s45 = scalar_select %p42, %s44, %s35
      %p46 = scmp.ge.s32.totalorder %s45, 2
      %s47 = scalar_select %p46, 0, %s45
      %s48 = ssub.s32 %s35, %s47
      %s49 = ssub.s32 %s36, %s43
      %s50 = sor.u32 %s48, %s49
      %p51 = scmp.eq.s32.totalorder %s50, 0
      %s53 = sadd.s32 %s52, 1
      %s54 = scalar_select %p51, %s52, %s53
      %p57 = pneg %p51
      %p58 = scmp.eq.s32.totalorder %s28, 1
      %p59 = por %p57, %p58
      %p60 = scmp.ne.s32.totalorder %s52, %s55
      %p61 = scmp.eq.s32.totalorder %s28, 0
      %p62 = por %p60, %p61
      %p63 = scmp.ne.s32.totalorder %s52, %s55
      %p64 = scmp.eq.s32.totalorder %s33, 1
      %p65 = por %p63, %p64
      %p66 = scmp.ne.s32.totalorder %s55, %s56
      %p67 = scmp.eq.s32.totalorder %s33, 0
      %p68 = por %p66, %p67
      %p69 = scmp.ne.s32.totalorder %s55, %s56
      %p70 = scmp.eq.s32.totalorder %s34, 1
      %p71 = por %p69, %p70
      %p73 = scmp.ne.s32.totalorder %s56, %s72
      %p74 = scmp.eq.s32.totalorder %s34, 0
      %p75 = por %p73, %p74
      %s76 = ssub.s32 %s35, %s47
      %p77 = scmp.eq.s32.totalorder %s76, 0
      %s79 = sadd.s32 %s78, 1
      %s80 = scalar_select %p77, %s78, %s79
      %p83 = pneg %p77
      %p84 = scmp.eq.s32.totalorder %s28, 1
      %p85 = por %p83, %p84
      %p86 = scmp.ne.s32.totalorder %s78, %s81
      %p87 = scmp.eq.s32.totalorder %s28, 0
      %p88 = por %p86, %p87
      %p89 = scmp.ne.s32.totalorder %s78, %s81
      %p90 = scmp.eq.s32.totalorder %s33, 1
      %p91 = por %p89, %p90
      %p92 = scmp.ne.s32.totalorder %s81, %s82
      %p93 = scmp.eq.s32.totalorder %s33, 0
      %p94 = por %p92, %p93
      %p95 = scmp.ne.s32.totalorder %s81, %s82
      %p96 = scmp.eq.s32.totalorder %s34, 1
      %p97 = por %p95, %p96
      %p99 = scmp.ne.s32.totalorder %s82, %s98
      %p100 = scmp.eq.s32.totalorder %s34, 0
      %p101 = por %p99, %p100
      %s102 = ssub.s32 %s35, %s47
      %p103 = scmp.eq.s32.totalorder %s102, 0
      %s105 = sadd.s32 %s104, 1
      %s106 = scalar_select %p103, %s104, %s105
      %p109 = pneg %p103
      %p110 = scmp.eq.s32.totalorder %s28, 1
      %p111 = por %p109, %p110
      %p112 = scmp.ne.s32.totalorder %s104, %s107
      %p113 = scmp.eq.s32.totalorder %s28, 0
      %p114 = por %p112, %p113
      %p115 = scmp.ne.s32.totalorder %s104, %s107
      %p116 = scmp.eq.s32.totalorder %s33, 1
      %p117 = por %p115, %p116
      %p118 = scmp.ne.s32.totalorder %s107, %s108
      %p119 = scmp.eq.s32.totalorder %s33, 0
      %p120 = por %p118, %p119
      %p121 = scmp.ne.s32.totalorder %s107, %s108
      %p122 = scmp.eq.s32.totalorder %s34, 1
      %p123 = por %p121, %p122
      %p125 = scmp.ne.s32.totalorder %s108, %s124
      %p126 = scmp.eq.s32.totalorder %s34, 0
      %p127 = por %p125, %p126
      %s128 = ssub.s32 %s35, %s47
      %p129 = scmp.eq.s32.totalorder %s128, 0
      %s131 = sadd.s32 %s130, 1
      %s132 = scalar_select %p129, %s130, %s131
      %p135 = pneg %p129
      %p136 = scmp.eq.s32.totalorder %s28, 1
      %p137 = por %p135, %p136
      %p138 = scmp.ne.s32.totalorder %s130, %s133
      %p139 = scmp.eq.s32.totalorder %s28, 0
      %p140 = por %p138, %p139
      %p141 = scmp.ne.s32.totalorder %s130, %s133
      %p142 = scmp.eq.s32.totalorder %s33, 1
      %p143 = por %p141, %p142
      %p144 = scmp.ne.s32.totalorder %s133, %s134
      %p145 = scmp.eq.s32.totalorder %s33, 0
      %p146 = por %p144, %p145
      %p147 = scmp.ne.s32.totalorder %s133, %s134
      %p148 = scmp.eq.s32.totalorder %s34, 1
      %p149 = por %p147, %p148
      %p151 = scmp.ne.s32.totalorder %s134, %s150
      %p152 = scmp.eq.s32.totalorder %s34, 0
      %p153 = por %p151, %p152
      %s154 = ssub.s32 %s35, %s47
      %s155 = ssub.s32 %s36, %s43
      %s156 = sor.u32 %s154, %s155
      %p157 = scmp.eq.s32.totalorder %s156, 0
      %s159 = sadd.s32 %s158, 1
      %s160 = scalar_select %p157, %s158, %s159
      %p163 = pneg %p157
      %p164 = scmp.eq.s32.totalorder %s28, 1
      %p165 = por %p163, %p164
      %p166 = scmp.ne.s32.totalorder %s158, %s161
      %p167 = scmp.eq.s32.totalorder %s28, 0
      %p168 = por %p166, %p167
      %p169 = scmp.ne.s32.totalorder %s158, %s161
      %p170 = scmp.eq.s32.totalorder %s33, 1
      %p171 = por %p169, %p170
      %p172 = scmp.ne.s32.totalorder %s161, %s162
      %p173 = scmp.eq.s32.totalorder %s33, 0
      %p174 = por %p172, %p173
      %p175 = scmp.ne.s32.totalorder %s161, %s162
      %p176 = scmp.eq.s32.totalorder %s34, 1
      %p177 = por %p175, %p176
      %p179 = scmp.ne.s32.totalorder %s162, %s178
      %p180 = scmp.eq.s32.totalorder %s34, 0
      %p181 = por %p179, %p180
      %s182 = ssub.s32 %s35, %s47
      %s183 = ssub.s32 %s36, %s43
      %s184 = sor.u32 %s182, %s183
      %p185 = scmp.eq.s32.totalorder %s184, 0
      %s187 = sadd.s32 %s186, 1
      %s188 = scalar_select %p185, %s186, %s187
      %p191 = pneg %p185
      %p192 = scmp.eq.s32.totalorder %s28, 1
      %p193 = por %p191, %p192
      %p194 = scmp.ne.s32.totalorder %s186, %s189
      %p195 = scmp.eq.s32.totalorder %s28, 0
      %p196 = por %p194, %p195
      %p197 = scmp.ne.s32.totalorder %s186, %s189
      %p198 = scmp.eq.s32.totalorder %s33, 1
      %p199 = por %p197, %p198
      %p200 = scmp.ne.s32.totalorder %s189, %s190
      %p201 = scmp.eq.s32.totalorder %s33, 0
      %p202 = por %p200, %p201
      %p203 = scmp.ne.s32.totalorder %s189, %s190
      %p204 = scmp.eq.s32.totalorder %s34, 1
      %p205 = por %p203, %p204
      %p207 = scmp.ne.s32.totalorder %s190, %s206
      %p208 = scmp.eq.s32.totalorder %s34, 0
      %p209 = por %p207, %p208
      %s210 = ssub.s32 %s35, %s47
      %s211 = ssub.s32 %s36, %s43
      %s212 = sor.u32 %s210, %s211
      %p213 = scmp.eq.s32.totalorder %s212, 0
      %s215 = sadd.s32 %s214, 1
      %s216 = scalar_select %p213, %s214, %s215
      %p219 = pneg %p213
      %p220 = scmp.eq.s32.totalorder %s28, 1
      %p221 = por %p219, %p220
      %p222 = scmp.ne.s32.totalorder %s214, %s217
      %p223 = scmp.eq.s32.totalorder %s28, 0
      %p224 = por %p222, %p223
      %p225 = scmp.ne.s32.totalorder %s214, %s217
      %p226 = scmp.eq.s32.totalorder %s33, 1
      %p227 = por %p225, %p226
      %p228 = scmp.ne.s32.totalorder %s217, %s218
      %p229 = scmp.eq.s32.totalorder %s33, 0
      %p230 = por %p228, %p229
      %p231 = scmp.ne.s32.totalorder %s217, %s218
      %p232 = scmp.eq.s32.totalorder %s34, 1
      %p233 = por %p231, %p232
      %p235 = scmp.ne.s32.totalorder %s218, %s234
      %p236 = scmp.eq.s32.totalorder %s34, 0
      %p237 = por %p235, %p236
      %p238 = scmp.le.s32.totalorder 1, %s28
      %p239 = scmp.lt.s32.totalorder %s28, 3
      %p240 = pnand %p238, %p239
      %p241 = pneg %p240
      // Predicated region
      $region9: #{tpu_custom_call.1} parent=5 // pred_check
        _
      $region10: #{tpu_custom_call.1} parent=5 // pred_check_branch
        %243 = sbr.rel (%p240) target = $region12
      $region11: #{tpu_custom_call.1} parent=5 // pred_region
        %s244 = ssub.s32 %s28, 1
      $region12: #{tpu_custom_call.1} parent=5 // pred_fallthru
        _
      %p245 = scmp.lt.s32.totalorder %s28, 2
      // Predicated region
      $region13: #{tpu_custom_call.1} parent=5 // pred_check
        %p246 = pneg %p245
      $region14: #{tpu_custom_call.1} parent=5 // pred_check_branch
        %248 = sbr.rel (%p246) target = $region16
      $region15: #{tpu_custom_call.1} parent=5 // pred_region
        // Predicated region
        $region17: #{tpu_custom_call.1} parent=15 // pred_check
          %p249 = pneg %p62
        $region18: #{tpu_custom_call.1} parent=15 // pred_check_branch
          %251 = sbr.rel (%p249) target = $region20
        $region19: #{tpu_custom_call.1} parent=15 // pred_region
          %s252 = sand.u32 %s52, 1
          %s253 = scalar_lea.sflag [#allocation3], %s252
          %s254 = sand.u32 %s52, 1
          %s255 = smul.addr %s254, 8
          %s256 = scalar_lea.vmem [#allocation2], %s255
          %s258 = ssub.s32 128, 128
          %259 = vsyncadd %s253, %s258
          %s260 = sadd.s32 %s36, %s35
          %s261 = smul.addr %s260, 128
          %s262 = scalar_lea.hbm %s0, %s261
          %s264 = sshll.u32 %s256, 4
          %s265 = int_to_ptr.vmem [resolvable:$true] %s264
          %267 = dma.hbm_to_vmem [thread:$0]  %s262, 128, %s265, %s253
        $region20: #{tpu_custom_call.1} parent=15 // pred_fallthru
          _
        // Predicated region
        $region21: #{tpu_custom_call.1} parent=15 // pred_check
          %p268 = pneg %p88
        $region22: #{tpu_custom_call.1} parent=15 // pred_check_branch
          %270 = sbr.rel (%p268) target = $region24
        $region23: #{tpu_custom_call.1} parent=15 // pred_region
          %s271 = sand.u32 %s28, 1
          %s272 = scalar_lea.sflag [#allocation6], %s271
          %s273 = sand.u32 %s78, 1
          %s274 = smul.addr %s273, 8
          %s275 = scalar_lea.vmem [#allocation5], %s274
          %s277 = ssub.s32 128, 128
          %278 = vsyncadd %s272, %s277
          %s279 = smul.addr %s35, 128
          %s280 = scalar_lea.hbm %s1, %s279
          %s282 = sshll.u32 %s275, 4
          %s283 = int_to_ptr.vmem [resolvable:$true] %s282
          %285 = dma.hbm_to_vmem [thread:$0]  %s280, 128, %s283, %s272
        $region24: #{tpu_custom_call.1} parent=15 // pred_fallthru
          _
        // Predicated region
        $region25: #{tpu_custom_call.1} parent=15 // pred_check
          %p286 = pneg %p114
        $region26: #{tpu_custom_call.1} parent=15 // pred_check_branch
          %288 = sbr.rel (%p286) target = $region28
        $region27: #{tpu_custom_call.1} parent=15 // pred_region
          %s289 = sand.u32 %s28, 1
          %s290 = scalar_lea.sflag [#allocation6], %s289
          %s291 = sand.u32 %s104, 1
          %s292 = smul.addr %s291, 8
          %s293 = scalar_lea.vmem [#allocation7], %s292
          %s295 = ssub.s32 128, 128
          %296 = vsyncadd %s290, %s295
          %s297 = smul.addr %s35, 128
          %s298 = scalar_lea.hbm %s2, %s297
          %s300 = sshll.u32 %s293, 4
          %s301 = int_to_ptr.vmem [resolvable:$true] %s300
          %303 = dma.hbm_to_vmem [thread:$0]  %s298, 128, %s301, %s290
        $region28: #{tpu_custom_call.1} parent=15 // pred_fallthru
          _
        // Predicated region
        $region29: #{tpu_custom_call.1} parent=15 // pred_check
          %p304 = pneg %p140
        $region30: #{tpu_custom_call.1} parent=15 // pred_check_branch
          %306 = sbr.rel (%p304) target = $region32
        $region31: #{tpu_custom_call.1} parent=15 // pred_region
          %p307 = scmp.lt.s32.totalorder %s35, 1
          %s308 = scalar_select %p307, %s35, 1
          %s309 = scalar_lea.vmem %s3, %s308
        $region32: #{tpu_custom_call.1} parent=15 // pred_fallthru
          _
        // Predicated region
        $region33: #{tpu_custom_call.1} parent=15 // pred_check
          %p310 = pneg %p168
        $region34: #{tpu_custom_call.1} parent=15 // pred_check_branch
          %312 = sbr.rel (%p310) target = $region36
        $region35: #{tpu_custom_call.1} parent=15 // pred_region
          %s313 = sand.u32 %s158, 1
          %s314 = scalar_lea.sflag [#allocation9], %s313
          %s315 = sand.u32 %s158, 1
          %s316 = smul.addr %s315, 8
          %s317 = scalar_lea.vmem [#allocation8], %s316
          %s319 = ssub.s32 128, 128
          %320 = vsyncadd %s314, %s319
          %s321 = sadd.s32 %s36, %s35
          %s322 = smul.addr %s321, 128
          %s323 = scalar_lea.hbm %s4, %s322
          %s325 = sshll.u32 %s317, 4
          %s326 = int_to_ptr.vmem [resolvable:$true] %s325
          %328 = dma.hbm_to_vmem [thread:$0]  %s323, 128, %s326, %s314
        $region36: #{tpu_custom_call.1} parent=15 // pred_fallthru
          _
      $region16: #{tpu_custom_call.1} parent=5 // pred_fallthru
        _
      %p329 = scmp.le.s32.totalorder 1, %s28
      %p330 = scmp.lt.s32.totalorder %s28, 3
      %p331 = pnand %p329, %p330
      %p332 = pneg %p331
      // Predicated region
      $region37: #{tpu_custom_call.1} parent=5 // pred_check
        _
      $region38: #{tpu_custom_call.1} parent=5 // pred_check_branch
        %334 = sbr.rel (%p331) target = $region40
      $region39: #{tpu_custom_call.1} parent=5 // pred_region
        %s335 = ssub.s32 %s28, 1
        %s336 = sand.u32 %s55, 1
        %s337 = scalar_lea.sflag [#allocation3], %s336
        %s338 = sand.u32 %s55, 1
        %s339 = smul.addr %s338, 8
        %s340 = scalar_lea.vmem [#allocation2], %s339
        // Predicated region
        $region41: #{tpu_custom_call.1} parent=39 // pred_check
          %p341 = pneg %p68
        $region42: #{tpu_custom_call.1} parent=39 // pred_check_branch
          %343 = sbr.rel (%p341) target = $region44
        $region43: #{tpu_custom_call.1} parent=39 // pred_region
          %344 = dma.done %s337, 128
        $region44: #{tpu_custom_call.1} parent=39 // pred_fallthru
          _
        %s345 = sand.u32 %s33, 1
        %s346 = scalar_lea.sflag [#allocation6], %s345
        %s347 = sand.u32 %s81, 1
        %s348 = smul.addr %s347, 8
        %s349 = scalar_lea.vmem [#allocation5], %s348
        // Predicated region
        $region45: #{tpu_custom_call.1} parent=39 // pred_check
          %p350 = pneg %p94
        $region46: #{tpu_custom_call.1} parent=39 // pred_check_branch
          %352 = sbr.rel (%p350) target = $region48
        $region47: #{tpu_custom_call.1} parent=39 // pred_region
          %353 = dma.done %s346, 128
        $region48: #{tpu_custom_call.1} parent=39 // pred_fallthru
          _
        %s354 = sand.u32 %s33, 1
        %s355 = scalar_lea.sflag [#allocation6], %s354
        %s356 = sand.u32 %s107, 1
        %s357 = smul.addr %s356, 8
        %s358 = scalar_lea.vmem [#allocation7], %s357
        // Predicated region
        $region49: #{tpu_custom_call.1} parent=39 // pred_check
          %p359 = pneg %p120
        $region50: #{tpu_custom_call.1} parent=39 // pred_check_branch
          %361 = sbr.rel (%p359) target = $region52
        $region51: #{tpu_custom_call.1} parent=39 // pred_region
          %362 = dma.done %s355, 128
        $region52: #{tpu_custom_call.1} parent=39 // pred_fallthru
          _
        %s363 = sand.u32 %s161, 1
        %s364 = scalar_lea.sflag [#allocation9], %s363
        %s365 = sand.u32 %s161, 1
        %s366 = smul.addr %s365, 8
        %s367 = scalar_lea.vmem [#allocation8], %s366
        // Predicated region
        $region53: #{tpu_custom_call.1} parent=39 // pred_check
          %p368 = pneg %p174
        $region54: #{tpu_custom_call.1} parent=39 // pred_check_branch
          %370 = sbr.rel (%p368) target = $region56
        $region55: #{tpu_custom_call.1} parent=39 // pred_region
          %371 = dma.done %s364, 128
        $region56: #{tpu_custom_call.1} parent=39 // pred_fallthru
          _
        %s372 = sand.u32 %s55, 1
        %s373 = scalar_lea.sflag [#allocation3], %s372
        %s374 = sand.u32 %s55, 1
        %s375 = smul.addr %s374, 8
        %s376 = scalar_lea.vmem [#allocation2], %s375
        %p377 = pneg %p68
        %p378 = pneg %p65
        %s379 = sand.u32 %s33, 1
        %s380 = scalar_lea.sflag [#allocation6], %s379
        %s381 = sand.u32 %s81, 1
        %s382 = smul.addr %s381, 8
        %s383 = scalar_lea.vmem [#allocation5], %s382
        %p384 = pneg %p94
        %p385 = pneg %p91
        %s386 = sand.u32 %s33, 1
        %s387 = scalar_lea.sflag [#allocation6], %s386
        %s388 = sand.u32 %s107, 1
        %s389 = smul.addr %s388, 8
        %s390 = scalar_lea.vmem [#allocation7], %s389
        %p391 = pneg %p120
        %p392 = pneg %p117
        %p393 = scmp.lt.s32.totalorder %s37, 1
        %s394 = scalar_select %p393, %s37, 1
        %s395 = scalar_lea.vmem %s3, %s394
        %p396 = pneg %p146
        %p397 = pneg %p143
        %s398 = sand.u32 %s161, 1
        %s399 = scalar_lea.sflag [#allocation9], %s398
        %s400 = sand.u32 %s161, 1
        %s401 = smul.addr %s400, 8
        %s402 = scalar_lea.vmem [#allocation8], %s401
        %p403 = pneg %p174
        %p404 = pneg %p171
        %p405 = pneg %p202
        %p406 = pneg %p199
        %s407 = sand.u32 %s189, 1
        %s408 = scalar_lea.sflag [#allocation4], %s407
        %s409 = sand.u32 %s189, 1
        %s410 = smul.addr %s409, 8
        %s411 = scalar_lea.vmem [#allocation10], %s410
        %p412 = pneg %p230
        %p413 = pneg %p227
        %s414 = sand.u32 %s217, 1
        %s415 = scalar_lea.sflag [#allocation12], %s414
        %s416 = sand.u32 %s217, 1
        %s417 = smul.addr %s416, 8
        %s418 = scalar_lea.vmem [#allocation11], %s417
        %p419 = scmp.lt.s32.totalorder %s37, 1
        %s420 = scalar_select %p419, %s37, 1
        %s421 = scalar_lea.vmem %s3, %s420
        %v422 = vld [vmem:[%s340] sm:$0xff]
        %v423 = vld [vmem:[%s349] sm:$0xff]
        %v424 = vld [vmem:[%s358] sm:$0xff]
        %v425 = vld [vmem:[%s367] sm:$0xff]
        %vm426 = vcmask 261120
        %v428 = vsel %vm426, %v422, 0
        %v431 = vsel %vm426, %v423, 0
        %433 = vmatprep.subr.mxu0 0.0
        %434 = vmatpush1.xpose.msra.mxu0 %v431
        %435 = vmatprep.subr.mxu0 0.0
        %436 = vmatpush1.xpose.msra.mxu0 0.0
        %437 = vmatprep.subr.mxu0 0.0
        %438 = vmatpush1.xpose.msra.mxu0 0.0
        %439 = vmatprep.subr.mxu0 0.0
        %440 = vmatpush1.xpose.msra.mxu0 0.0
        %441 = vmatprep.subr.mxu0 0.0
        %442 = vmatpush1.xpose.msra.mxu0 0.0
        %443 = vmatprep.subr.mxu0 0.0
        %444 = vmatpush1.xpose.msra.mxu0 0.0
        %445 = vmatprep.subr.mxu0 0.0
        %446 = vmatpush1.xpose.msra.mxu0 0.0
        %447 = vmatprep.subr.mxu0 0.0
        %448 = vmatpush1.xpose.msra.mxu0 0.0
        %449 = vmatprep.subr.mxu0 0.0
        %450 = vmatpush1.xpose.msra.mxu0 0.0
        %451 = vmatprep.subr.mxu0 0.0
        %452 = vmatpush1.xpose.msra.mxu0 0.0
        %453 = vmatprep.subr.mxu0 0.0
        %454 = vmatpush1.xpose.msra.mxu0 0.0
        %455 = vmatprep.subr.mxu0 0.0
        %456 = vmatpush1.xpose.msra.mxu0 0.0
        %457 = vmatprep.subr.mxu0 0.0
        %458 = vmatpush1.xpose.msra.mxu0 0.0
        %459 = vmatprep.subr.mxu0 0.0
        %460 = vmatpush1.xpose.msra.mxu0 0.0
        %461 = vmatprep.subr.mxu0 0.0
        %462 = vmatpush1.xpose.msra.mxu0 0.0
        %463 = vmatprep.subr.mxu0 0.0
        %464 = vmatpush1.xpose.msra.mxu0 0.0
        %465 = vmatprep.subr.mxu0 0.0
        %466 = vmatpush1.xpose.msra.mxu0 0.0
        %467 = vmatprep.subr.mxu0 0.0
        %468 = vmatpush1.xpose.msra.mxu0 0.0
        %469 = vmatprep.subr.mxu0 0.0
        %470 = vmatpush1.xpose.msra.mxu0 0.0
        %471 = vmatprep.subr.mxu0 0.0
        %472 = vmatpush1.xpose.msra.mxu0 0.0
        %473 = vmatprep.subr.mxu0 0.0
        %474 = vmatpush1.xpose.msra.mxu0 0.0
        %475 = vmatprep.subr.mxu0 0.0
        %476 = vmatpush1.xpose.msra.mxu0 0.0
        %477 = vmatprep.subr.mxu0 0.0
        %478 = vmatpush1.xpose.msra.mxu0 0.0
        %479 = vmatprep.subr.mxu0 0.0
        %480 = vmatpush1.xpose.msra.mxu0 0.0
        %481 = vmatprep.subr.mxu0 0.0
        %482 = vmatpush1.xpose.msra.mxu0 0.0
        %483 = vmatprep.subr.mxu0 0.0
        %484 = vmatpush1.xpose.msra.mxu0 0.0
        %485 = vmatprep.subr.mxu0 0.0
        %486 = vmatpush1.xpose.msra.mxu0 0.0
        %487 = vmatprep.subr.mxu0 0.0
        %488 = vmatpush1.xpose.msra.mxu0 0.0
        %489 = vmatprep.subr.mxu0 0.0
        %490 = vmatpush1.xpose.msra.mxu0 0.0
        %491 = vmatprep.subr.mxu0 0.0
        %492 = vmatpush1.xpose.msra.mxu0 0.0
        %493 = vmatprep.subr.mxu0 0.0
        %494 = vmatpush1.xpose.msra.mxu0 0.0
        %495 = vmatprep.subr.mxu0 0.0
        %496 = vmatpush1.xpose.msra.mxu0 0.0
        %497 = vmatprep.mubr.f32.mxu0 0.0
        %498 = vmatmul.mubr.f32.gmra.mrb[0].mxu0 %v428
        %v499 = vpop.f32.mrb[0].mxu0
        %v500 = vadd.f32 %v425, %v499
        %v501 = vpop.f32.mrb[0].mxu0
        %502 = vdwg.mxu0
        %v503 = vmul.f32 %v500, 0.17677669
        %v504 = vld [vmem:[%s421] sm:$0x1]
        %vm505 = vcmp.eq.s32.totalorder %v504, 0
        %v506 = vsel %vm505, 1, 0
        %v507 = vlaneseq
        %v508 = vshrl.u32 %v507, 7
        %v509 = vsub.s32 0, %v508
        %v510 = vrot.slane %v506, %v509
        %vm511 = vcmp.eq.s32.totalorder %v510, 1
        %v512 = vsel %vm511, -1000.0, %v503
        %vm513 = vcmask 64512
        %v514 = vsel %vm513, %v512, -inf
        %515 = vmax.xlane.f32.xlu0 %v514
        %v516 = vpop.xlane.xlu0 %515
        %v517 = vsub.f32 %v512, %v516
        %v518 = vmul.f32 %v517, 1.442695
        %v519 = vpow.pop %v518
        %v520 = vsel %vm513, %v519, 0.0
        %521 = vadd.xlane.f32.xlu0 %v520
        %v522 = vpop.xlane.xlu0 %521
        %v523 = vrcp.pop %v522
        %v524 = vmul.f32 1.0, %v523
        %v525 = vmul.f32 %v519, %v524
        %v527 = vsel %vm513, %v525, 0
        %529 = vmatprep.subr.mxu0 0.0
        %530 = vmatpush1.msra.mxu0 %v424
        %531 = vmatprep.subr.mxu0 0.0
        %532 = vmatpush1.msra.mxu0 0.0
        %533 = vmatprep.subr.mxu0 0.0
        %534 = vmatpush1.msra.mxu0 0.0
        %535 = vmatprep.subr.mxu0 0.0
        %536 = vmatpush1.msra.mxu0 0.0
        %537 = vmatprep.subr.mxu0 0.0
        %538 = vmatpush1.msra.mxu0 0.0
        %539 = vmatprep.subr.mxu0 0.0
        %540 = vmatpush1.msra.mxu0 0.0
        %541 = vmatprep.subr.mxu0 0.0
        %542 = vmatpush1.msra.mxu0 0.0
        %543 = vmatprep.subr.mxu0 0.0
        %544 = vmatpush1.msra.mxu0 0.0
        %545 = vmatprep.subr.mxu0 0.0
        %546 = vmatpush1.msra.mxu0 0.0
        %547 = vmatprep.subr.mxu0 0.0
        %548 = vmatpush1.msra.mxu0 0.0
        %549 = vmatprep.subr.mxu0 0.0
        %550 = vmatpush1.msra.mxu0 0.0
        %551 = vmatprep.subr.mxu0 0.0
        %552 = vmatpush1.msra.mxu0 0.0
        %553 = vmatprep.subr.mxu0 0.0
        %554 = vmatpush1.msra.mxu0 0.0
        %555 = vmatprep.subr.mxu0 0.0
        %556 = vmatpush1.msra.mxu0 0.0
        %557 = vmatprep.subr.mxu0 0.0
        %558 = vmatpush1.msra.mxu0 0.0
        %559 = vmatprep.subr.mxu0 0.0
        %560 = vmatpush1.msra.mxu0 0.0
        %561 = vmatprep.subr.mxu0 0.0
        %562 = vmatpush1.msra.mxu0 0.0
        %563 = vmatprep.subr.mxu0 0.0
        %564 = vmatpush1.msra.mxu0 0.0
        %565 = vmatprep.subr.mxu0 0.0
        %566 = vmatpush1.msra.mxu0 0.0
        %567 = vmatprep.subr.mxu0 0.0
        %568 = vmatpush1.msra.mxu0 0.0
        %569 = vmatprep.subr.mxu0 0.0
        %570 = vmatpush1.msra.mxu0 0.0
        %571 = vmatprep.subr.mxu0 0.0
        %572 = vmatpush1.msra.mxu0 0.0
        %573 = vmatprep.subr.mxu0 0.0
        %574 = vmatpush1.msra.mxu0 0.0
        %575 = vmatprep.subr.mxu0 0.0
        %576 = vmatpush1.msra.mxu0 0.0
        %577 = vmatprep.subr.mxu0 0.0
        %578 = vmatpush1.msra.mxu0 0.0
        %579 = vmatprep.subr.mxu0 0.0
        %580 = vmatpush1.msra.mxu0 0.0
        %581 = vmatprep.subr.mxu0 0.0
        %582 = vmatpush1.msra.mxu0 0.0
        %583 = vmatprep.subr.mxu0 0.0
        %584 = vmatpush1.msra.mxu0 0.0
        %585 = vmatprep.subr.mxu0 0.0
        %586 = vmatpush1.msra.mxu0 0.0
        %587 = vmatprep.subr.mxu0 0.0
        %588 = vmatpush1.msra.mxu0 0.0
        %589 = vmatprep.subr.mxu0 0.0
        %590 = vmatpush1.msra.mxu0 0.0
        %591 = vmatprep.subr.mxu0 0.0
        %592 = vmatpush1.msra.mxu0 0.0
        %593 = vmatprep.mubr.f32.mxu0 0.0
        %594 = vmatmul.mubr.f32.gmra.mrb[0].mxu0 %v527
        %v595 = vpop.f32.mrb[0].mxu0
        %v596 = vadd.f32 0.0, %v595
        %v597 = vpop.f32.mrb[0].mxu0
        %598 = vdwg.mxu0
        %599 = vst.msk [vmem:[%s411] sm:$0xff] %vm426, %v596
        %600 = vst.msk [vmem:[%s418] sm:$0xff] %vm513, %v525
        %s601 = sand.u32 %s189, 1
        %s602 = scalar_lea.sflag [#allocation4], %s601
        %s603 = sand.u32 %s189, 1
        %s604 = smul.addr %s603, 8
        %s605 = scalar_lea.vmem [#allocation10], %s604
        %s606 = sand.u32 %s217, 1
        %s607 = scalar_lea.sflag [#allocation12], %s606
        %s608 = sand.u32 %s217, 1
        %s609 = smul.addr %s608, 8
        %s610 = scalar_lea.vmem [#allocation11], %s609
        // Predicated region
        $region57: #{tpu_custom_call.1} parent=39 // pred_check
          %p611 = pneg %p199
        $region58: #{tpu_custom_call.1} parent=39 // pred_check_branch
          %613 = sbr.rel (%p611) target = $region60
        $region59: #{tpu_custom_call.1} parent=39 // pred_region
          %s615 = ssub.s32 128, 128
          %616 = vsyncadd %s602, %s615
          %s617 = sadd.s32 %s38, %s37
          %s618 = smul.addr %s617, 128
          %s619 = scalar_lea.hbm %s5, %s618
          %s621 = sshll.u32 %s605, 4
          %s622 = int_to_ptr.vmem [resolvable:$true] %s621
          %624 = dma.vmem_to_hbm [thread:$0]  %s622, 128, %s619, %s602
        $region60: #{tpu_custom_call.1} parent=39 // pred_fallthru
          _
        // Predicated region
        $region61: #{tpu_custom_call.1} parent=39 // pred_check
          %p625 = pneg %p227
        $region62: #{tpu_custom_call.1} parent=39 // pred_check_branch
          %627 = sbr.rel (%p625) target = $region64
        $region63: #{tpu_custom_call.1} parent=39 // pred_region
          %s629 = ssub.s32 128, 128
          %630 = vsyncadd %s607, %s629
          %s631 = sadd.s32 %s38, %s37
          %s632 = smul.addr %s631, 128
          %s633 = scalar_lea.hbm %s6, %s632
          %s635 = sshll.u32 %s610, 4
          %s636 = int_to_ptr.vmem [resolvable:$true] %s635
          %638 = dma.vmem_to_hbm [thread:$0]  %s636, 128, %s633, %s607
        $region64: #{tpu_custom_call.1} parent=39 // pred_fallthru
          _
      $region40: #{tpu_custom_call.1} parent=5 // pred_fallthru
        _
      %p639 = scmp.le.s32.totalorder 2, %s28
      // Predicated region
      $region65: #{tpu_custom_call.1} parent=5 // pred_check
        %p640 = pneg %p639
      $region66: #{tpu_custom_call.1} parent=5 // pred_check_branch
        %642 = sbr.rel (%p640) target = $region68
      $region67: #{tpu_custom_call.1} parent=5 // pred_region
        %s643 = ssub.s32 %s28, 2
        // Predicated region
        $region69: #{tpu_custom_call.1} parent=67 // pred_check
          %p644 = pneg %p205
        $region70: #{tpu_custom_call.1} parent=67 // pred_check_branch
          %646 = sbr.rel (%p644) target = $region72
        $region71: #{tpu_custom_call.1} parent=67 // pred_region
          %s647 = sand.u32 %s190, 1
          %s648 = scalar_lea.sflag [#allocation4], %s647
          %s649 = sand.u32 %s190, 1
          %s650 = smul.addr %s649, 8
          %s651 = scalar_lea.vmem [#allocation10], %s650
          %652 = dma.done %s648, 128
        $region72: #{tpu_custom_call.1} parent=67 // pred_fallthru
          _
        // Predicated region
        $region73: #{tpu_custom_call.1} parent=67 // pred_check
          %p653 = pneg %p233
        $region74: #{tpu_custom_call.1} parent=67 // pred_check_branch
          %655 = sbr.rel (%p653) target = $region76
        $region75: #{tpu_custom_call.1} parent=67 // pred_region
          %s656 = sand.u32 %s218, 1
          %s657 = scalar_lea.sflag [#allocation12], %s656
          %s658 = sand.u32 %s218, 1
          %s659 = smul.addr %s658, 8
          %s660 = scalar_lea.vmem [#allocation11], %s659
          %661 = dma.done %s657, 128
        $region76: #{tpu_custom_call.1} parent=67 // pred_fallthru
          _
      $region68: #{tpu_custom_call.1} parent=5 // pred_fallthru
        _
    $region6: #{tpu_custom_call.1} parent=1 // loop_footer
      %s32 = sadd.s32 1, %s28
    $region7: #{tpu_custom_call.1} parent=1 // loop_footer_branch
      %27 = sbr.rel target = $region3
    $region8: #{tpu_custom_call.1} parent=1 // loop_exit
      _
    %662 = vsyncpa [#allocation3], 1
    %s663 = scalar_lea.sflag [#allocation3], 1
    %664 = vsyncpa %s663, 1
    %665 = vsyncpa [#allocation6], 1
    %s666 = scalar_lea.sflag [#allocation6], 1
    %667 = vsyncpa %s666, 1
    %668 = vsyncpa [#allocation9], 1
    %s669 = scalar_lea.sflag [#allocation9], 1
    %670 = vsyncpa %s669, 1
    %671 = vsyncpa [#allocation4], 1
    %s672 = scalar_lea.sflag [#allocation4], 1
    %673 = vsyncpa %s672, 1
    %674 = vsyncpa [#allocation12], 1
    %s675 = scalar_lea.sflag [#allocation12], 1
    %676 = vsyncpa %s675, 1

</llo_original>
